<compile_context>
chip_gen: v7x
topology: tpu7x:2x2x1
jax: 0.10.0
libtpu: 0.0.40
codegen_flags: <defaults>
</compile_context>

<pallas_src>
import functools
import inspect

import jax
import jax.numpy as jnp
from jax.experimental import pallas as pl
from jax.experimental.pallas import tpu as pltpu


# --------------------------------------------------------------------------
# Kernel: grid = (node row blocks, K blocks of the aggregation reduction).
# --------------------------------------------------------------------------
def gcn_mlp_kernel(a_ref, drow_ref, xwh_ref, xwl_ref, bg_ref, w1_ref, b1_ref,
                   w2_ref, b2_ref, out_ref, acc_ref):
    # a_ref   : (TM, TK)  bf16, exact 0/1/2 tile of (A + I)
    # drow_ref: (TM, 1)   f32,  d^{-1/2} of these rows
    # xwh/xwl : (TK, Hp)  bf16, hi/lo split of d^{-1/2}[:, None] * (X @ Wg)
    # weights/biases: f32, zero-padded lane-dense, single-buffered residents
    # acc_ref : (TM, Hp)  f32 scratch accumulator (persists across K steps)
    k = pl.program_id(1)

    @pl.when(k == 0)
    def _():
        acc_ref[...] = jnp.zeros_like(acc_ref)

    # GCN aggregation with bf16 MXU operands (1 MXU pass per dot, not ~3 for
    # f32xf32).  A entries are 0/1/2 (exact in bf16); hi+lo recovers ~f32
    # accuracy of xw with f32 accumulation.
    a = a_ref[...]
    acc_ref[...] += (
        jnp.dot(a, xwh_ref[...], preferred_element_type=jnp.float32)
        + jnp.dot(a, xwl_ref[...], preferred_element_type=jnp.float32))

    @pl.when(k == pl.num_programs(1) - 1)
    def _():
        # Row scaling + GCN bias, then Linear -> ReLU -> Linear (logits).
        # MLP kept f32: O(N*H^2) is negligible next to the O(N^2*H) aggregation.
        h = drow_ref[...] * acc_ref[...] + bg_ref[...]
        h1 = jnp.maximum(
            jnp.dot(h, w1_ref[...], preferred_element_type=jnp.float32)
            + b1_ref[...], 0.0)
        out_ref[...] = (
            jnp.dot(h1, w2_ref[...], preferred_element_type=jnp.float32)
            + b2_ref[...])


# --------------------------------------------------------------------------
# Helpers: padding, VMEM budgeting, tile selection.
# --------------------------------------------------------------------------
def _round_up(x, m):
    return ((x + m - 1) // m) * m


def _cdiv(a, b):
    return (a + b - 1) // b


def _pad2(w, rows, cols):
    out = jnp.zeros((rows, cols), w.dtype)
    return out.at[:w.shape[0], :w.shape[1]].set(w)


def _supports_single_buffering():
    if not hasattr(pl, "Buffered"):
        return False
    try:
        return "pipeline_mode" in inspect.signature(pl.BlockSpec).parameters
    except Exception:
        return False


_USE_BUFFERED = _supports_single_buffering()


def _spec(shape, index_map, single_buffer=False):
    """BlockSpec, single-buffered when the block is grid-invariant."""
    if single_buffer and _USE_BUFFERED:
        return pl.BlockSpec(shape, index_map, pipeline_mode=pl.Buffered(1))
    return pl.BlockSpec(shape, index_map)


def _vmem_budget():
    """Generation-aware (tile budget, vmem_limit cap) in bytes."""
    cap = 0
    try:
        cap = int(pltpu.get_tpu_info().vmem_capacity_bytes)
    except Exception:
        cap = 0
    if cap <= 0 or cap <= 64 * 1024 * 1024:       # v7x (64 MiB) or unknown
        return 40 * 1024 * 1024, 48 * 1024 * 1024
    return 96 * 1024 * 1024, 110 * 1024 * 1024    # v5e / v6e (128 MiB parts)


def _vmem_bytes(tm, tk, h_pad, c_pad, grid_k):
    a_tiles = 2 * tm * tk * 2                        # bf16 A tile, double-buffered
    xw_buf = 1 if (grid_k == 1 and _USE_BUFFERED) else 2
    xw_tiles = xw_buf * tk * h_pad * 2 * 2           # hi + lo, bf16
    d_tiles = 2 * tm * 4
    out_tiles = 2 * tm * c_pad * 4
    weights = (h_pad * h_pad + h_pad * c_pad + 2 * h_pad + c_pad) * 4
    if not _USE_BUFFERED:
        weights *= 2
    acc = tm * h_pad * 4
    epilogue = 2 * tm * h_pad * 4                    # h / h1 temporaries
    return a_tiles + xw_tiles + d_tiles + out_tiles + weights + acc + epilogue


def _pick_tiles(n_pad, h_pad, c_pad, budget):
    """Minimize estimated HBM traffic within the VMEM budget.

    grid_k == 1 keeps xw fully resident (read once); otherwise xw tiles are
    re-streamed once per row block, so larger TM is strongly preferred.
    """
    best_key, best = None, None
    for tm in (1024, 512, 256, 128):
        if tm > n_pad:
            continue
        for tk_c in (32768, 16384, 8192, 4096, 2048, 1024, 512, 256, 128):
            tk = min(tk_c, n_pad)
            gk = _cdiv(n_pad, tk)
            if _vmem_bytes(tm, tk, h_pad, c_pad, gk) > budget:
                continue
            gr = _cdiv(n_pad, tm)
            xw_reads = (1 if gk == 1 else gr) * n_pad * h_pad * 4
            traffic = n_pad * n_pad * 2 + xw_reads
            key = (traffic, -tm, -tk)
            if best_key is None or key < best_key:
                best_key, best = key, (tm, tk)
    if best is None:
        return min(128, n_pad), min(128, n_pad)
    return best


# --------------------------------------------------------------------------
# Wrapper: adjacency build + padding + tiny X@Wg, then the tiled pallas_call.
# --------------------------------------------------------------------------
@functools.partial(jax.jit, static_argnames=())
def gcn_mlp_forward(x, edge_index, params):
    """x: (N, F) float32, edge_index: (2, E) int32. Returns (N, C) logits."""
    wg, bg, w1, b1, w2, b2 = params
    n = x.shape[0]
    hidden = wg.shape[1]
    out_dim = w2.shape[1]

    # Lane-dense padded sizes.
    n_pad = _round_up(max(n, 1), 128)
    h_pad = _round_up(hidden, 128)
    c_pad = _round_up(out_dim, 128)

    budget, limit_cap = _vmem_budget()
    tm, tk = _pick_tiles(n_pad, h_pad, c_pad, budget)
    if _cdiv(n_pad, tm) == 1 and tm >= 16:
        # Keep >= 2 blocks on the "parallel" row axis so both v7x TensorCores
        # get work (neutral on single-TC v5e/v6e).
        tm = max(8, _round_up(tm // 2, 8))
    rows_pad = _round_up(n_pad, tm)
    cols_pad = _round_up(n_pad, tk)
    grid_rows = rows_pad // tm
    grid_k = cols_pad // tk

    # ---- adjacency with self loops, built directly in bf16 (0/1/2 exact) ----
    # A[target, source] = 1 so (A @ X)[i] sums features of i's sources.
    a = jnp.zeros((rows_pad, cols_pad), jnp.bfloat16)
    a = a.at[edge_index[1], edge_index[0]].set(1.0)        # .set dedupes multi-edges
    diag = jnp.arange(n)
    a = a.at[diag, diag].add(1.0)                          # self loops (real nodes)
    deg = jnp.sum(a, axis=1, dtype=jnp.float32)            # exact small-int sums
    d_inv_sqrt = jnp.where(deg > 0, 1.0 / jnp.sqrt(deg), 0.0)
    d_row = d_inv_sqrt.reshape(rows_pad, 1)
    d_col = jnp.zeros((cols_pad,), jnp.float32).at[:n].set(d_inv_sqrt[:n])

    # ---- hoist the tiny feature transform out of the hot loop ----
    xw = jnp.dot(x, wg, preferred_element_type=jnp.float32)          # (N, H)
    xw_pad = jnp.zeros((cols_pad, h_pad), jnp.float32).at[:n, :hidden].set(xw)
    xw_scaled = d_col[:, None] * xw_pad                              # fold col-scale
    # hi/lo bf16 split of xw: keeps ~f32 accuracy while feeding the MXU bf16.
    xw_hi = xw_scaled.astype(jnp.bfloat16)
    xw_lo = (xw_scaled - xw_hi.astype(jnp.float32)).astype(jnp.bfloat16)

    # ---- pad weights / biases to lane-dense shapes ----
    bg_p = _pad2(bg, 1, h_pad)
    w1_p = _pad2(w1, h_pad, h_pad)
    b1_p = _pad2(b1, 1, h_pad)
    w2_p = _pad2(w2, h_pad, c_pad)
    b2_p = _pad2(b2, 1, c_pad)

    xw_read_bytes = (1 if grid_k == 1 else grid_rows) * cols_pad * h_pad * 4
    cost = pl.CostEstimate(
        flops=(4 * rows_pad * cols_pad * h_pad          # A@hi + A@lo
               + 2 * rows_pad * h_pad * h_pad
               + 2 * rows_pad * h_pad * c_pad),
        transcendentals=0,
        bytes_accessed=(rows_pad * cols_pad * 2         # A (bf16)
                        + xw_read_bytes                 # xw hi+lo reads
                        + rows_pad * 4                  # d^{-1/2}
                        + rows_pad * c_pad * 4          # output write
                        + (h_pad * h_pad + h_pad * c_pad
                           + 3 * h_pad + c_pad) * 4),   # weights / biases
    )
    vmem_est = _vmem_bytes(tm, tk, h_pad, c_pad, grid_k)
    vmem_limit = int(min(max(int(1.25 * vmem_est), 32 * 1024 * 1024), limit_cap))

    out_pad = pl.pallas_call(
        gcn_mlp_kernel,
        out_shape=jax.ShapeDtypeStruct((rows_pad, c_pad), jnp.float32),
        grid=(grid_rows, grid_k),
        in_specs=[
            pl.BlockSpec((tm, tk), lambda i, k: (i, k)),               # A tile
            pl.BlockSpec((tm, 1), lambda i, k: (i, 0)),                # d^{-1/2} rows
            _spec((tk, h_pad), lambda i, k: (k, 0), grid_k == 1),      # xw hi
            _spec((tk, h_pad), lambda i, k: (k, 0), grid_k == 1),      # xw lo
            _spec((1, h_pad), lambda i, k: (0, 0), True),              # bg
            _spec((h_pad, h_pad), lambda i, k: (0, 0), True),          # w1
            _spec((1, h_pad), lambda i, k: (0, 0), True),              # b1
            _spec((h_pad, c_pad), lambda i, k: (0, 0), True),          # w2
            _spec((1, c_pad), lambda i, k: (0, 0), True),              # b2
        ],
        out_specs=pl.BlockSpec((tm, c_pad), lambda i, k: (i, 0)),
        scratch_shapes=[pltpu.VMEM((tm, h_pad), jnp.float32)],
        compiler_params=pltpu.CompilerParams(
            dimension_semantics=("parallel", "arbitrary"),
            vmem_limit_bytes=vmem_limit,
        ),
        cost_estimate=cost,
    )(a, d_row, xw_hi, xw_lo, bg_p, w1_p, b1_p, w2_p, b2_p)

    return out_pad[:n, :out_dim]


# --------------------------------------------------------------------------
# Parameter init + pure-JAX reference (f32 end-to-end).
# --------------------------------------------------------------------------
def init_params(key, f_in, hidden, out_dim):
    ks = jax.random.split(key, 6)

    def glorot(k, shape):
        lim = jnp.sqrt(6.0 / (shape[0] + shape[1]))
        return jax.random.uniform(k, shape, jnp.float32, -lim, lim)

    wg = glorot(ks[0], (f_in, hidden))
    bg = jnp.zeros((1, hidden), jnp.float32)
    w1 = glorot(ks[1], (hidden, hidden))
    b1 = jax.random.uniform(ks[2], (1, hidden), jnp.float32, -0.05, 0.05)
    w2 = glorot(ks[3], (hidden, out_dim))
    b2 = jax.random.uniform(ks[4], (1, out_dim), jnp.float32, -0.05, 0.05)
    return (wg, bg, w1, b1, w2, b2)


def reference_forward(x, edge_index, params):
    n = x.shape[0]
    a = jnp.zeros((n, n), jnp.float32).at[edge_index[1], edge_index[0]].set(1.0)
    a = a + jnp.eye(n, dtype=jnp.float32)
    deg = a.sum(axis=1)
    dis = jnp.where(deg > 0, 1.0 / jnp.sqrt(deg), 0.0)
    a_hat = dis[:, None] * a * dis[None, :]
    wg, bg, w1, b1, w2, b2 = params
    h = a_hat @ (x @ wg) + bg
    h1 = jnp.maximum(h @ w1 + b1, 0.0)
    return h1 @ w2 + b2


if __name__ == "__main__":
    key = jax.random.PRNGKey(0)
    k_x, k_e, k_p = jax.random.split(key, 3)

    N, F_IN, HIDDEN, OUT = 16, 8, 32, 4
    E = 40

    x = jax.random.normal(k_x, (N, F_IN), jnp.float32)
    edge_index = jax.random.randint(k_e, (2, E), 0, N, jnp.int32)
    params = init_params(k_p, F_IN, HIDDEN, OUT)

    out = gcn_mlp_forward(x, edge_index, params)
    out = jax.block_until_ready(out)

    ref = reference_forward(x, edge_index, params)
    assert out.shape == (N, OUT)
    assert jnp.allclose(out, ref, atol=1e-4, rtol=1e-4), "mismatch vs reference"

    print("KERNEL_OK")
</pallas_src>

<mosaic_0001>
module attributes {stable_mosaic.version = 11 : i64} {
  func.func @gcn_mlp_kernel(%arg0: i32, %arg1: i32, %arg2: memref<64x128xbf16, #tpu.memory_space<vmem>>, %arg3: memref<64x1xf32, #tpu.memory_space<vmem>>, %arg4: memref<128x128xbf16, #tpu.memory_space<vmem>>, %arg5: memref<128x128xbf16, #tpu.memory_space<vmem>>, %arg6: memref<1x128xf32, #tpu.memory_space<vmem>>, %arg7: memref<128x128xf32, #tpu.memory_space<vmem>>, %arg8: memref<1x128xf32, #tpu.memory_space<vmem>>, %arg9: memref<128x128xf32, #tpu.memory_space<vmem>>, %arg10: memref<1x128xf32, #tpu.memory_space<vmem>>, %arg11: memref<64x128xf32, #tpu.memory_space<vmem>>, %arg12: memref<64x128xf32, #tpu.memory_space<vmem>>) attributes {dimension_semantics = [#tpu.dimension_semantics<parallel>, #tpu.dimension_semantics<arbitrary>], iteration_bounds = array<i64: 2, 1>, scalar_prefetch = 0 : i64, scratch_operands = 1 : i64, tpu.core_type = #tpu.core_type<tc>, window_params = [{transform_indices = @transform_0, window_bounds = array<i64: 64, 128>}, {transform_indices = @transform_1, window_bounds = array<i64: 64, 1>}, {pipeline_mode = #tpu.pipeline_mode<synchronous>, transform_indices = @transform_2, window_bounds = array<i64: 128, 128>}, {pipeline_mode = #tpu.pipeline_mode<synchronous>, transform_indices = @transform_3, window_bounds = array<i64: 128, 128>}, {pipeline_mode = #tpu.pipeline_mode<synchronous>, transform_indices = @transform_4, window_bounds = array<i64: 1, 128>}, {pipeline_mode = #tpu.pipeline_mode<synchronous>, transform_indices = @transform_5, window_bounds = array<i64: 128, 128>}, {pipeline_mode = #tpu.pipeline_mode<synchronous>, transform_indices = @transform_6, window_bounds = array<i64: 1, 128>}, {pipeline_mode = #tpu.pipeline_mode<synchronous>, transform_indices = @transform_7, window_bounds = array<i64: 128, 128>}, {pipeline_mode = #tpu.pipeline_mode<synchronous>, transform_indices = @transform_8, window_bounds = array<i64: 1, 128>}, {transform_indices = @transform_9, window_bounds = array<i64: 64, 128>}]} {
    %c0_i32 = arith.constant 0 : i32
    %0 = arith.cmpi eq, %arg1, %c0_i32 : i32
    %1 = arith.extui %0 : i1 to i32
    %c0_i32_0 = arith.constant 0 : i32
    %2 = arith.cmpi ne, %1, %c0_i32_0 : i32
    scf.if %2 {
      %cst_13 = arith.constant 0.000000e+00 : f32
      %15 = vector.broadcast %cst_13 : f32 to vector<64x128xf32>
      %c0_14 = arith.constant 0 : index
      %c0_15 = arith.constant 0 : index
      %16 = vector.load %arg12[%c0_14, %c0_15] : memref<64x128xf32, #tpu.memory_space<vmem>>, vector<64x128xf32>
      tpu.vector_store %arg12[%c0_14, %c0_15], %15 {strides = array<i32>} : memref<64x128xf32, #tpu.memory_space<vmem>>, vector<64x128xf32>,
    } else {
    }
    %c0 = arith.constant 0 : index
    %c0_1 = arith.constant 0 : index
    %3 = vector.load %arg2[%c0, %c0_1] : memref<64x128xbf16, #tpu.memory_space<vmem>>, vector<64x128xbf16>
    %c0_2 = arith.constant 0 : index
    %c0_3 = arith.constant 0 : index
    %4 = vector.load %arg12[%c0_2, %c0_3] : memref<64x128xf32, #tpu.memory_space<vmem>>, vector<64x128xf32>
    %c0_4 = arith.constant 0 : index
    %c0_5 = arith.constant 0 : index
    %5 = vector.load %arg4[%c0_4, %c0_5] : memref<128x128xbf16, #tpu.memory_space<vmem>>, vector<128x128xbf16>
    %cst = arith.constant dense<0.000000e+00> : vector<64x128xf32>
    %6 = tpu.matmul %3, %5, %cst {dimension_numbers = #tpu.dot_dimension_numbers<[1], [0], [0], [1], [0, 0, 1, 1], [], []>} : vector<64x128xbf16>, vector<128x128xbf16>, vector<64x128xf32> -> vector<64x128xf32>
    %c0_6 = arith.constant 0 : index
    %c0_7 = arith.constant 0 : index
    %7 = vector.load %arg5[%c0_6, %c0_7] : memref<128x128xbf16, #tpu.memory_space<vmem>>, vector<128x128xbf16>
    %cst_8 = arith.constant dense<0.000000e+00> : vector<64x128xf32>
    %8 = tpu.matmul %3, %7, %cst_8 {dimension_numbers = #tpu.dot_dimension_numbers<[1], [0], [0], [1], [0, 0, 1, 1], [], []>} : vector<64x128xbf16>, vector<128x128xbf16>, vector<64x128xf32> -> vector<64x128xf32>
    %9 = arith.addf %6, %8 : vector<64x128xf32>
    %10 = arith.addf %4, %9 : vector<64x128xf32>
    %c0_9 = arith.constant 0 : index
    %c0_10 = arith.constant 0 : index
    %11 = vector.load %arg12[%c0_9, %c0_10] : memref<64x128xf32, #tpu.memory_space<vmem>>, vector<64x128xf32>
    tpu.vector_store %arg12[%c0_9, %c0_10], %10 {strides = array<i32>} : memref<64x128xf32, #tpu.memory_space<vmem>>, vector<64x128xf32>,
    %c0_i32_11 = arith.constant 0 : i32
    %12 = arith.cmpi eq, %arg1, %c0_i32_11 : i32
    %13 = arith.extui %12 : i1 to i32
    %c0_i32_12 = arith.constant 0 : i32
    %14 = arith.cmpi ne, %13, %c0_i32_12 : i32
    scf.if %14 {
      %c0_13 = arith.constant 0 : index
      %c0_14 = arith.constant 0 : index
      %15 = vector.load %arg3[%c0_13, %c0_14] : memref<64x1xf32, #tpu.memory_space<vmem>>, vector<64x1xf32>
      %c0_15 = arith.constant 0 : index
      %c0_16 = arith.constant 0 : index
      %16 = vector.load %arg12[%c0_15, %c0_16] : memref<64x128xf32, #tpu.memory_space<vmem>>, vector<64x128xf32>
      %17 = vector.broadcast %15 : vector<64x1xf32> to vector<64x128xf32>
      %18 = arith.mulf %17, %16 : vector<64x128xf32>
      %c0_17 = arith.constant 0 : index
      %c0_18 = arith.constant 0 : index
      %19 = vector.load %arg6[%c0_17, %c0_18] : memref<1x128xf32, #tpu.memory_space<vmem>>, vector<1x128xf32>
      %20 = vector.broadcast %19 : vector<1x128xf32> to vector<64x128xf32>
      %21 = arith.addf %18, %20 : vector<64x128xf32>
      %c0_19 = arith.constant 0 : index
      %c0_20 = arith.constant 0 : index
      %22 = vector.load %arg7[%c0_19, %c0_20] : memref<128x128xf32, #tpu.memory_space<vmem>>, vector<128x128xf32>
      %cst_21 = arith.constant dense<0.000000e+00> : vector<64x128xf32>
      %23 = tpu.matmul %21, %22, %cst_21 {dimension_numbers = #tpu.dot_dimension_numbers<[1], [0], [0], [1], [0, 0, 1, 1], [], []>} : vector<64x128xf32>, vector<128x128xf32>, vector<64x128xf32> -> vector<64x128xf32>
      %c0_22 = arith.constant 0 : index
      %c0_23 = arith.constant 0 : index
      %24 = vector.load %arg8[%c0_22, %c0_23] : memref<1x128xf32, #tpu.memory_space<vmem>>, vector<1x128xf32>
      %25 = vector.broadcast %24 : vector<1x128xf32> to vector<64x128xf32>
      %26 = arith.addf %23, %25 : vector<64x128xf32>
      %cst_24 = arith.constant 0.000000e+00 : f32
      %27 = vector.broadcast %cst_24 : f32 to vector<64x128xf32>
      %28 = arith.maximumf %26, %27 : vector<64x128xf32>
      %c0_25 = arith.constant 0 : index
      %c0_26 = arith.constant 0 : index
      %29 = vector.load %arg9[%c0_25, %c0_26] : memref<128x128xf32, #tpu.memory_space<vmem>>, vector<128x128xf32>
      %cst_27 = arith.constant dense<0.000000e+00> : vector<64x128xf32>
      %30 = tpu.matmul %28, %29, %cst_27 {dimension_numbers = #tpu.dot_dimension_numbers<[1], [0], [0], [1], [0, 0, 1, 1], [], []>} : vector<64x128xf32>, vector<128x128xf32>, vector<64x128xf32> -> vector<64x128xf32>
      %c0_28 = arith.constant 0 : index
      %c0_29 = arith.constant 0 : index
      %31 = vector.load %arg10[%c0_28, %c0_29] : memref<1x128xf32, #tpu.memory_space<vmem>>, vector<1x128xf32>
      %32 = vector.broadcast %31 : vector<1x128xf32> to vector<64x128xf32>
      %33 = arith.addf %30, %32 : vector<64x128xf32>
      %c0_30 = arith.constant 0 : index
      %c0_31 = arith.constant 0 : index
      %34 = vector.load %arg11[%c0_30, %c0_31] : memref<64x128xf32, #tpu.memory_space<vmem>>, vector<64x128xf32>
      tpu.vector_store %arg11[%c0_30, %c0_31], %33 {strides = array<i32>} : memref<64x128xf32, #tpu.memory_space<vmem>>, vector<64x128xf32>,
    } else {
    }
    return
  }
  func.func @transform_0(%arg0: i32, %arg1: i32) -> (i32, i32) {
    %c0_i32 = arith.constant 0 : i32
    return %arg0, %arg1 : i32, i32
  }
  func.func @transform_1(%arg0: i32, %arg1: i32) -> (i32, i32) {
    %c0_i32 = arith.constant 0 : i32
    %c0_i32_0 = arith.constant 0 : i32
    return %arg0, %c0_i32 : i32, i32
  }
  func.func @transform_2(%arg0: i32, %arg1: i32) -> (i32, i32) {
    %c0_i32 = arith.constant 0 : i32
    %c0_i32_0 = arith.constant 0 : i32
    return %arg1, %c0_i32 : i32, i32
  }
  func.func @transform_3(%arg0: i32, %arg1: i32) -> (i32, i32) {
    %c0_i32 = arith.constant 0 : i32
    %c0_i32_0 = arith.constant 0 : i32
    return %arg1, %c0_i32 : i32, i32
  }
  func.func @transform_4(%arg0: i32, %arg1: i32) -> (i32, i32) {
    %c0_i32 = arith.constant 0 : i32
    %c0_i32_0 = arith.constant 0 : i32
    %c0_i32_1 = arith.constant 0 : i32
    return %c0_i32, %c0_i32_0 : i32, i32
  }
  func.func @transform_5(%arg0: i32, %arg1: i32) -> (i32, i32) {
    %c0_i32 = arith.constant 0 : i32
    %c0_i32_0 = arith.constant 0 : i32
    %c0_i32_1 = arith.constant 0 : i32
    return %c0_i32, %c0_i32_0 : i32, i32
  }
  func.func @transform_6(%arg0: i32, %arg1: i32) -> (i32, i32) {
    %c0_i32 = arith.constant 0 : i32
    %c0_i32_0 = arith.constant 0 : i32
    %c0_i32_1 = arith.constant 0 : i32
    return %c0_i32, %c0_i32_0 : i32, i32
  }
  func.func @transform_7(%arg0: i32, %arg1: i32) -> (i32, i32) {
    %c0_i32 = arith.constant 0 : i32
    %c0_i32_0 = arith.constant 0 : i32
    %c0_i32_1 = arith.constant 0 : i32
    return %c0_i32, %c0_i32_0 : i32, i32
  }
  func.func @transform_8(%arg0: i32, %arg1: i32) -> (i32, i32) {
    %c0_i32 = arith.constant 0 : i32
    %c0_i32_0 = arith.constant 0 : i32
    %c0_i32_1 = arith.constant 0 : i32
    return %c0_i32, %c0_i32_0 : i32, i32
  }
  func.func @transform_9(%arg0: i32, %arg1: i32) -> (i32, i32) {
    %c0_i32 = arith.constant 0 : i32
    %c0_i32_0 = arith.constant 0 : i32
    return %arg0, %c0_i32 : i32, i32
  }
}

</mosaic_0001>

<llo_original>
// kernel: gcn_mlp_forward.1
$region0: #{gcn_mlp_forward.1}
  #allocation0 [shape = 'u32[]', space=smem, size = 0x4, offset = 0x4, fixed_abs, tag = 'smem constant byte address 0x4 - core index']
  #allocation1 [shape = 'u32[144,128]{1,0:T(1,128)}', space=vmem, size = 0x12000, scoped, tag = 'internal scratch']
  #allocation2 [shape = 'f32[64,128]{1,0:T(8,128)}', space=vmem, size = 0x8000, scoped, tag = 'scratch operand']
  %s0 = inlined_call_operand.vmem [shape: bf16[128,128], index: 0, kind: input, shape index: {}]
  %s1 = inlined_call_operand.vmem [shape: f32[128,1], index: 1, kind: input, shape index: {}]
  %s2 = inlined_call_operand.vmem [shape: bf16[128,128], index: 2, kind: input, shape index: {}]
  %s3 = inlined_call_operand.vmem [shape: bf16[128,128], index: 3, kind: input, shape index: {}]
  %s4 = inlined_call_operand.vmem [shape: f32[1,128], index: 4, kind: input, shape index: {}]
  %s5 = inlined_call_operand.vmem [shape: f32[128,128], index: 5, kind: input, shape index: {}]
  %s6 = inlined_call_operand.vmem [shape: f32[1,128], index: 6, kind: input, shape index: {}]
  %s7 = inlined_call_operand.vmem [shape: f32[128,128], index: 7, kind: input, shape index: {}]
  %s8 = inlined_call_operand.vmem [shape: f32[1,128], index: 8, kind: input, shape index: {}]
  %s9 = inlined_call_operand.vmem [shape: f32[128,128], index: 9, kind: output, shape index: {}]
  %s10 = sld [smem:[#allocation0]]
  $region77: #{gcn_mlp_forward.1} parent=0
    _
  %s12 = ssub.s32 1, %s10
  %s13 = scalar_select 0, %s12, %s10
  loop: start=0, step=1, limit=4
  $region2: #{gcn_mlp_forward.1} parent=0 // loop_pre_header
    _
  $region3: #{gcn_mlp_forward.1} parent=0 // loop_header
    %s15 = sphi 0, %s19
    %p16 = scmp.ge.s32.totalorder %s15, 4
    %s22 = sphi 0, %s34
    %s23 = sphi 0, %s30
    %s24 = sphi 0, %s22
    %s25 = sphi 0, %s23
    %s26 = sphi 0, %s24
    %s27 = sphi 0, %s25
    %s39 = sphi 0, %s41
    %s42 = sphi 0, %s39
    %s43 = sphi 0, %s42
    %s59 = sphi 0, %s43
    %s65 = sphi 0, %s67
    %s68 = sphi 0, %s65
    %s69 = sphi 0, %s68
    %s85 = sphi 0, %s69
    %s91 = sphi 0, %s93
    %s94 = sphi 0, %s91
    %s95 = sphi 0, %s94
    %s111 = sphi 0, %s95
    %s117 = sphi 0, %s119
    %s120 = sphi 0, %s117
    %s121 = sphi 0, %s120
    %s137 = sphi 0, %s121
    %s141 = sphi 0, %s141
    %s143 = sphi 0, %s141
    %s144 = sphi 0, %s143
    %s158 = sphi 0, %s144
    %s162 = sphi 0, %s162
    %s164 = sphi 0, %s162
    %s165 = sphi 0, %s164
    %s179 = sphi 0, %s165
    %s183 = sphi 0, %s183
    %s185 = sphi 0, %s183
    %s186 = sphi 0, %s185
    %s200 = sphi 0, %s186
    %s204 = sphi 0, %s204
    %s206 = sphi 0, %s204
    %s207 = sphi 0, %s206
    %s221 = sphi 0, %s207
    %s225 = sphi 0, %s225
    %s227 = sphi 0, %s225
    %s228 = sphi 0, %s227
    %s242 = sphi 0, %s228
    %s248 = sphi 0, %s250
    %s251 = sphi 0, %s248
    %s252 = sphi 0, %s251
    %s268 = sphi 0, %s252
  $region4: #{gcn_mlp_forward.1} parent=0 // loop_header_branch
    %18 = sbr.rel (%p16) target = $region8
  $region5: #{gcn_mlp_forward.1} parent=0 // loop_body
    %s20 = ssub.s32 %s15, 1
    %s21 = ssub.s32 %s15, 2
    %s28 = sadd.s32 1, %s23
    %p29 = scmp.ge.s32.totalorder %s28, 1
    %s30 = scalar_select %p29, 0, %s28
    %s31 = sadd.s32 1, %s22
    %s32 = scalar_select %p29, %s31, %s22
    %p33 = scmp.ge.s32.totalorder %s32, 2
    %s34 = scalar_select %p33, 0, %s32
    %s35 = ssub.s32 %s22, %s34
    %s36 = ssub.s32 %s23, %s30
    %s37 = sor.u32 %s35, %s36
    %p38 = scmp.eq.s32.totalorder %s37, 0
    %s40 = sadd.s32 %s39, 1
    %s41 = scalar_select %p38, %s39, %s40
    %p44 = pneg %p38
    %p45 = scmp.eq.s32.totalorder %s15, 1
    %p46 = por %p44, %p45
    %p47 = scmp.ne.s32.totalorder %s39, %s42
    %p48 = scmp.eq.s32.totalorder %s15, 0
    %p49 = por %p47, %p48
    %p50 = scmp.ne.s32.totalorder %s39, %s42
    %p51 = scmp.eq.s32.totalorder %s20, 1
    %p52 = por %p50, %p51
    %p53 = scmp.ne.s32.totalorder %s42, %s43
    %p54 = scmp.eq.s32.totalorder %s20, 0
    %p55 = por %p53, %p54
    %p56 = scmp.ne.s32.totalorder %s42, %s43
    %p57 = scmp.eq.s32.totalorder %s21, 1
    %p58 = por %p56, %p57
    %p60 = scmp.ne.s32.totalorder %s43, %s59
    %p61 = scmp.eq.s32.totalorder %s21, 0
    %p62 = por %p60, %p61
    %s63 = ssub.s32 %s22, %s34
    %p64 = scmp.eq.s32.totalorder %s63, 0
    %s66 = sadd.s32 %s65, 1
    %s67 = scalar_select %p64, %s65, %s66
    %p70 = pneg %p64
    %p71 = scmp.eq.s32.totalorder %s15, 1
    %p72 = por %p70, %p71
    %p73 = scmp.ne.s32.totalorder %s65, %s68
    %p74 = scmp.eq.s32.totalorder %s15, 0
    %p75 = por %p73, %p74
    %p76 = scmp.ne.s32.totalorder %s65, %s68
    %p77 = scmp.eq.s32.totalorder %s20, 1
    %p78 = por %p76, %p77
    %p79 = scmp.ne.s32.totalorder %s68, %s69
    %p80 = scmp.eq.s32.totalorder %s20, 0
    %p81 = por %p79, %p80
    %p82 = scmp.ne.s32.totalorder %s68, %s69
    %p83 = scmp.eq.s32.totalorder %s21, 1
    %p84 = por %p82, %p83
    %p86 = scmp.ne.s32.totalorder %s69, %s85
    %p87 = scmp.eq.s32.totalorder %s21, 0
    %p88 = por %p86, %p87
    %s89 = ssub.s32 %s23, %s30
    %p90 = scmp.eq.s32.totalorder %s89, 0
    %s92 = sadd.s32 %s91, 1
    %s93 = scalar_select %p90, %s91, %s92
    %p96 = pneg %p90
    %p97 = scmp.eq.s32.totalorder %s15, 1
    %p98 = por %p96, %p97
    %p99 = scmp.ne.s32.totalorder %s91, %s94
    %p100 = scmp.eq.s32.totalorder %s15, 0
    %p101 = por %p99, %p100
    %p102 = scmp.ne.s32.totalorder %s91, %s94
    %p103 = scmp.eq.s32.totalorder %s20, 1
    %p104 = por %p102, %p103
    %p105 = scmp.ne.s32.totalorder %s94, %s95
    %p106 = scmp.eq.s32.totalorder %s20, 0
    %p107 = por %p105, %p106
    %p108 = scmp.ne.s32.totalorder %s94, %s95
    %p109 = scmp.eq.s32.totalorder %s21, 1
    %p110 = por %p108, %p109
    %p112 = scmp.ne.s32.totalorder %s95, %s111
    %p113 = scmp.eq.s32.totalorder %s21, 0
    %p114 = por %p112, %p113
    %s115 = ssub.s32 %s23, %s30
    %p116 = scmp.eq.s32.totalorder %s115, 0
    %s118 = sadd.s32 %s117, 1
    %s119 = scalar_select %p116, %s117, %s118
    %p122 = pneg %p116
    %p123 = scmp.eq.s32.totalorder %s15, 1
    %p124 = por %p122, %p123
    %p125 = scmp.ne.s32.totalorder %s117, %s120
    %p126 = scmp.eq.s32.totalorder %s15, 0
    %p127 = por %p125, %p126
    %p128 = scmp.ne.s32.totalorder %s117, %s120
    %p129 = scmp.eq.s32.totalorder %s20, 1
    %p130 = por %p128, %p129
    %p131 = scmp.ne.s32.totalorder %s120, %s121
    %p132 = scmp.eq.s32.totalorder %s20, 0
    %p133 = por %p131, %p132
    %p134 = scmp.ne.s32.totalorder %s120, %s121
    %p135 = scmp.eq.s32.totalorder %s21, 1
    %p136 = por %p134, %p135
    %p138 = scmp.ne.s32.totalorder %s121, %s137
    %p139 = scmp.eq.s32.totalorder %s21, 0
    %p140 = por %p138, %p139
    %s142 = sadd.s32 %s141, 1
    %p145 = scmp.eq.s32.totalorder %s15, 1
    %p146 = scmp.ne.s32.totalorder %s141, %s143
    %p147 = scmp.eq.s32.totalorder %s15, 0
    %p148 = por %p146, %p147
    %p149 = scmp.ne.s32.totalorder %s141, %s143
    %p150 = scmp.eq.s32.totalorder %s20, 1
    %p151 = por %p149, %p150
    %p152 = scmp.ne.s32.totalorder %s143, %s144
    %p153 = scmp.eq.s32.totalorder %s20, 0
    %p154 = por %p152, %p153
    %p155 = scmp.ne.s32.totalorder %s143, %s144
    %p156 = scmp.eq.s32.totalorder %s21, 1
    %p157 = por %p155, %p156
    %p159 = scmp.ne.s32.totalorder %s144, %s158
    %p160 = scmp.eq.s32.totalorder %s21, 0
    %p161 = por %p159, %p160
    %s163 = sadd.s32 %s162, 1
    %p166 = scmp.eq.s32.totalorder %s15, 1
    %p167 = scmp.ne.s32.totalorder %s162, %s164
    %p168 = scmp.eq.s32.totalorder %s15, 0
    %p169 = por %p167, %p168
    %p170 = scmp.ne.s32.totalorder %s162, %s164
    %p171 = scmp.eq.s32.totalorder %s20, 1
    %p172 = por %p170, %p171
    %p173 = scmp.ne.s32.totalorder %s164, %s165
    %p174 = scmp.eq.s32.totalorder %s20, 0
    %p175 = por %p173, %p174
    %p176 = scmp.ne.s32.totalorder %s164, %s165
    %p177 = scmp.eq.s32.totalorder %s21, 1
    %p178 = por %p176, %p177
    %p180 = scmp.ne.s32.totalorder %s165, %s179
    %p181 = scmp.eq.s32.totalorder %s21, 0
    %p182 = por %p180, %p181
    %s184 = sadd.s32 %s183, 1
    %p187 = scmp.eq.s32.totalorder %s15, 1
    %p188 = scmp.ne.s32.totalorder %s183, %s185
    %p189 = scmp.eq.s32.totalorder %s15, 0
    %p190 = por %p188, %p189
    %p191 = scmp.ne.s32.totalorder %s183, %s185
    %p192 = scmp.eq.s32.totalorder %s20, 1
    %p193 = por %p191, %p192
    %p194 = scmp.ne.s32.totalorder %s185, %s186
    %p195 = scmp.eq.s32.totalorder %s20, 0
    %p196 = por %p194, %p195
    %p197 = scmp.ne.s32.totalorder %s185, %s186
    %p198 = scmp.eq.s32.totalorder %s21, 1
    %p199 = por %p197, %p198
    %p201 = scmp.ne.s32.totalorder %s186, %s200
    %p202 = scmp.eq.s32.totalorder %s21, 0
    %p203 = por %p201, %p202
    %s205 = sadd.s32 %s204, 1
    %p208 = scmp.eq.s32.totalorder %s15, 1
    %p209 = scmp.ne.s32.totalorder %s204, %s206
    %p210 = scmp.eq.s32.totalorder %s15, 0
    %p211 = por %p209, %p210
    %p212 = scmp.ne.s32.totalorder %s204, %s206
    %p213 = scmp.eq.s32.totalorder %s20, 1
    %p214 = por %p212, %p213
    %p215 = scmp.ne.s32.totalorder %s206, %s207
    %p216 = scmp.eq.s32.totalorder %s20, 0
    %p217 = por %p215, %p216
    %p218 = scmp.ne.s32.totalorder %s206, %s207
    %p219 = scmp.eq.s32.totalorder %s21, 1
    %p220 = por %p218, %p219
    %p222 = scmp.ne.s32.totalorder %s207, %s221
    %p223 = scmp.eq.s32.totalorder %s21, 0
    %p224 = por %p222, %p223
    %s226 = sadd.s32 %s225, 1
    %p229 = scmp.eq.s32.totalorder %s15, 1
    %p230 = scmp.ne.s32.totalorder %s225, %s227
    %p231 = scmp.eq.s32.totalorder %s15, 0
    %p232 = por %p230, %p231
    %p233 = scmp.ne.s32.totalorder %s225, %s227
    %p234 = scmp.eq.s32.totalorder %s20, 1
    %p235 = por %p233, %p234
    %p236 = scmp.ne.s32.totalorder %s227, %s228
    %p237 = scmp.eq.s32.totalorder %s20, 0
    %p238 = por %p236, %p237
    %p239 = scmp.ne.s32.totalorder %s227, %s228
    %p240 = scmp.eq.s32.totalorder %s21, 1
    %p241 = por %p239, %p240
    %p243 = scmp.ne.s32.totalorder %s228, %s242
    %p244 = scmp.eq.s32.totalorder %s21, 0
    %p245 = por %p243, %p244
    %s246 = ssub.s32 %s22, %s34
    %p247 = scmp.eq.s32.totalorder %s246, 0
    %s249 = sadd.s32 %s248, 1
    %s250 = scalar_select %p247, %s248, %s249
    %p253 = pneg %p247
    %p254 = scmp.eq.s32.totalorder %s15, 1
    %p255 = por %p253, %p254
    %p256 = scmp.ne.s32.totalorder %s248, %s251
    %p257 = scmp.eq.s32.totalorder %s15, 0
    %p258 = por %p256, %p257
    %p259 = scmp.ne.s32.totalorder %s248, %s251
    %p260 = scmp.eq.s32.totalorder %s20, 1
    %p261 = por %p259, %p260
    %p262 = scmp.ne.s32.totalorder %s251, %s252
    %p263 = scmp.eq.s32.totalorder %s20, 0
    %p264 = por %p262, %p263
    %p265 = scmp.ne.s32.totalorder %s251, %s252
    %p266 = scmp.eq.s32.totalorder %s21, 1
    %p267 = por %p265, %p266
    %p269 = scmp.ne.s32.totalorder %s252, %s268
    %p270 = scmp.eq.s32.totalorder %s21, 0
    %p271 = por %p269, %p270
    %p272 = scmp.le.s32.totalorder 1, %s15
    %p273 = scmp.lt.s32.totalorder %s15, 3
    %p274 = pnand %p272, %p273
    %p275 = pneg %p274
    // Predicated region
    $region9: #{gcn_mlp_forward.1} parent=5 // pred_check
      _
    $region10: #{gcn_mlp_forward.1} parent=5 // pred_check_branch
      %277 = sbr.rel (%p274) target = $region12
    $region11: #{gcn_mlp_forward.1} parent=5 // pred_region
      %s278 = ssub.s32 %s15, 1
      // Predicated region
      $region13: #{gcn_mlp_forward.1} parent=11 // pred_check
        %p279 = pneg %p107
      $region14: #{gcn_mlp_forward.1} parent=11 // pred_check_branch
        %281 = sbr.rel (%p279) target = $region16
      $region15: #{gcn_mlp_forward.1} parent=11 // pred_region
        %s282 = smul.u32 16, %s25
        %p283 = scmp.lt.s32.totalorder %s282, 15
        %s284 = scalar_select %p283, %s282, 15
        %s285 = smul.addr %s284, 4
        %s286 = scalar_lea.vmem %s2, %s285
        %s287 = smul.u32 16, %s25
      $region16: #{gcn_mlp_forward.1} parent=11 // pred_fallthru
        _
      // Predicated region
      $region17: #{gcn_mlp_forward.1} parent=11 // pred_check
        %p288 = pneg %p133
      $region18: #{gcn_mlp_forward.1} parent=11 // pred_check_branch
        %290 = sbr.rel (%p288) target = $region20
      $region19: #{gcn_mlp_forward.1} parent=11 // pred_region
        %s291 = smul.u32 16, %s25
        %p292 = scmp.lt.s32.totalorder %s291, 15
        %s293 = scalar_select %p292, %s291, 15
        %s294 = smul.addr %s293, 4
        %s295 = scalar_lea.vmem %s3, %s294
        %s296 = smul.u32 16, %s25
      $region20: #{gcn_mlp_forward.1} parent=11 // pred_fallthru
        _
      // Predicated region
      $region21: #{gcn_mlp_forward.1} parent=11 // pred_check
        %p297 = pneg %p154
      $region22: #{gcn_mlp_forward.1} parent=11 // pred_check_branch
        %299 = sbr.rel (%p297) target = $region24
      $region23: #{gcn_mlp_forward.1} parent=11 // pred_region
        _
      $region24: #{gcn_mlp_forward.1} parent=11 // pred_fallthru
        _
      // Predicated region
      $region25: #{gcn_mlp_forward.1} parent=11 // pred_check
        %p300 = pneg %p175
      $region26: #{gcn_mlp_forward.1} parent=11 // pred_check_branch
        %302 = sbr.rel (%p300) target = $region28
      $region27: #{gcn_mlp_forward.1} parent=11 // pred_region
        _
      $region28: #{gcn_mlp_forward.1} parent=11 // pred_fallthru
        _
      // Predicated region
      $region29: #{gcn_mlp_forward.1} parent=11 // pred_check
        %p303 = pneg %p196
      $region30: #{gcn_mlp_forward.1} parent=11 // pred_check_branch
        %305 = sbr.rel (%p303) target = $region32
      $region31: #{gcn_mlp_forward.1} parent=11 // pred_region
        _
      $region32: #{gcn_mlp_forward.1} parent=11 // pred_fallthru
        _
      // Predicated region
      $region33: #{gcn_mlp_forward.1} parent=11 // pred_check
        %p306 = pneg %p217
      $region34: #{gcn_mlp_forward.1} parent=11 // pred_check_branch
        %308 = sbr.rel (%p306) target = $region36
      $region35: #{gcn_mlp_forward.1} parent=11 // pred_region
        _
      $region36: #{gcn_mlp_forward.1} parent=11 // pred_fallthru
        _
      // Predicated region
      $region37: #{gcn_mlp_forward.1} parent=11 // pred_check
        %p309 = pneg %p238
      $region38: #{gcn_mlp_forward.1} parent=11 // pred_check_branch
        %311 = sbr.rel (%p309) target = $region40
      $region39: #{gcn_mlp_forward.1} parent=11 // pred_region
        _
      $region40: #{gcn_mlp_forward.1} parent=11 // pred_fallthru
        _
    $region12: #{gcn_mlp_forward.1} parent=5 // pred_fallthru
      _
    %p312 = scmp.lt.s32.totalorder %s15, 2
    // Predicated region
    $region41: #{gcn_mlp_forward.1} parent=5 // pred_check
      %p313 = pneg %p312
    $region42: #{gcn_mlp_forward.1} parent=5 // pred_check_branch
      %315 = sbr.rel (%p313) target = $region44
    $region43: #{gcn_mlp_forward.1} parent=5 // pred_region
      // Predicated region
      $region45: #{gcn_mlp_forward.1} parent=43 // pred_check
        %p316 = pneg %p49
      $region46: #{gcn_mlp_forward.1} parent=43 // pred_check_branch
        %318 = sbr.rel (%p316) target = $region48
      $region47: #{gcn_mlp_forward.1} parent=43 // pred_region
        %s319 = smul.u32 8, %s22
        %p320 = scmp.lt.s32.totalorder %s319, 15
        %s321 = scalar_select %p320, %s319, 15
        %p322 = scmp.lt.s32.totalorder %s23, 0
        %s323 = scalar_select %p322, %s23, 0
        %s324 = sadd.s32 %s323, %s321
        %s325 = smul.addr %s324, 4
        %s326 = scalar_lea.vmem %s0, %s325
        %s327 = smul.u32 8, %s22
      $region48: #{gcn_mlp_forward.1} parent=43 // pred_fallthru
        _
      // Predicated region
      $region49: #{gcn_mlp_forward.1} parent=43 // pred_check
        %p328 = pneg %p75
      $region50: #{gcn_mlp_forward.1} parent=43 // pred_check_branch
        %330 = sbr.rel (%p328) target = $region52
      $region51: #{gcn_mlp_forward.1} parent=43 // pred_region
        %s331 = smul.u32 8, %s22
        %p332 = scmp.lt.s32.totalorder %s331, 15
        %s333 = scalar_select %p332, %s331, 15
        %s334 = smul.addr %s333, 8
        %s335 = scalar_lea.vmem %s1, %s334
        %s336 = smul.u32 8, %s22
      $region52: #{gcn_mlp_forward.1} parent=43 // pred_fallthru
        _
    $region44: #{gcn_mlp_forward.1} parent=5 // pred_fallthru
      _
    %p337 = scmp.le.s32.totalorder 1, %s15
    %p338 = scmp.lt.s32.totalorder %s15, 3
    %p339 = pnand %p337, %p338
    %p340 = pneg %p339
    // Predicated region
    $region53: #{gcn_mlp_forward.1} parent=5 // pred_check
      _
    $region54: #{gcn_mlp_forward.1} parent=5 // pred_check_branch
      %342 = sbr.rel (%p339) target = $region56
    $region55: #{gcn_mlp_forward.1} parent=5 // pred_region
      %s343 = ssub.s32 %s15, 1
      %s344 = smul.u32 8, %s24
      %p345 = scmp.lt.s32.totalorder %s344, 15
      %s346 = scalar_select %p345, %s344, 15
      %p347 = scmp.lt.s32.totalorder %s25, 0
      %s348 = scalar_select %p347, %s25, 0
      %s349 = sadd.s32 %s348, %s346
      %s350 = smul.addr %s349, 4
      %s351 = scalar_lea.vmem %s0, %s350
      %p352 = pneg %p55
      %p353 = pneg %p52
      %s354 = smul.u32 8, %s24
      %p355 = scmp.lt.s32.totalorder %s354, 15
      %s356 = scalar_select %p355, %s354, 15
      %s357 = smul.addr %s356, 8
      %s358 = scalar_lea.vmem %s1, %s357
      %p359 = pneg %p81
      %p360 = pneg %p78
      %s361 = smul.u32 16, %s25
      %p362 = scmp.lt.s32.totalorder %s361, 15
      %s363 = scalar_select %p362, %s361, 15
      %s364 = smul.addr %s363, 4
      %s365 = scalar_lea.vmem %s2, %s364
      %p366 = pneg %p107
      %p367 = pneg %p104
      %s368 = smul.u32 16, %s25
      %p369 = scmp.lt.s32.totalorder %s368, 15
      %s370 = scalar_select %p369, %s368, 15
      %s371 = smul.addr %s370, 4
      %s372 = scalar_lea.vmem %s3, %s371
      %p373 = pneg %p133
      %p374 = pneg %p130
      %p375 = pneg %p154
      %p376 = pneg %p151
      %p377 = pneg %p175
      %p378 = pneg %p172
      %p379 = pneg %p196
      %p380 = pneg %p193
      %p381 = pneg %p217
      %p382 = pneg %p214
      %p383 = pneg %p238
      %p384 = pneg %p235
      %p385 = pneg %p264
      %p386 = pneg %p261
      %s387 = smul.u32 8, %s24
      %p388 = scmp.lt.s32.totalorder %s387, 15
      %s389 = scalar_select %p388, %s387, 15
      %s390 = smul.addr %s389, 8
      %s391 = scalar_lea.vmem %s9, %s390
      %s392 = smul.u32 8, %s24
      %p393 = scmp.lt.s32.totalorder %s392, 15
      %s394 = scalar_select %p393, %s392, 15
      %p395 = scmp.lt.s32.totalorder %s25, 0
      %s396 = scalar_select %p395, %s25, 0
      %s397 = sadd.s32 %s396, %s394
      %s398 = smul.addr %s397, 4
      %s399 = scalar_lea.vmem %s0, %s398
      %s400 = smul.u32 8, %s24
      %s401 = smul.u32 8, %s24
      %p402 = scmp.lt.s32.totalorder %s401, 15
      %s403 = scalar_select %p402, %s401, 15
      %s404 = smul.addr %s403, 8
      %s405 = scalar_lea.vmem %s1, %s404
      %s406 = smul.u32 8, %s24
      %s407 = smul.u32 16, %s25
      %p408 = scmp.lt.s32.totalorder %s407, 15
      %s409 = scalar_select %p408, %s407, 15
      %s410 = smul.addr %s409, 4
      %s411 = scalar_lea.vmem %s2, %s410
      %s412 = smul.u32 16, %s25
      %s413 = smul.u32 16, %s25
      %p414 = scmp.lt.s32.totalorder %s413, 15
      %s415 = scalar_select %p414, %s413, 15
      %s416 = smul.addr %s415, 4
      %s417 = scalar_lea.vmem %s3, %s416
      %s418 = smul.u32 16, %s25
      %s419 = smul.u32 8, %s24
      %p420 = scmp.lt.s32.totalorder %s419, 15
      %s421 = scalar_select %p420, %s419, 15
      %s422 = smul.addr %s421, 8
      %s423 = scalar_lea.vmem %s9, %s422
      %s424 = smul.u32 8, %s24
      %p426 = scmp.eq.s32.totalorder %s25, 0
      // Predicated region
      $region57: #{gcn_mlp_forward.1} parent=55 // pred_check
        %p427 = pneg %p426
      $region58: #{gcn_mlp_forward.1} parent=55 // pred_check_branch
        %429 = sbr.rel (%p427) target = $region60
      $region59: #{gcn_mlp_forward.1} parent=55 // pred_region
        %430 = vst [vmem:[#allocation2] sm:$0xff] 0.0
        %431 = vst [vmem:[#allocation2 + $0x8] sm:$0xff] 0.0
        %432 = vst [vmem:[#allocation2 + $0x10] sm:$0xff] 0.0
        %433 = vst [vmem:[#allocation2 + $0x18] sm:$0xff] 0.0
        %434 = vst [vmem:[#allocation2 + $0x20] sm:$0xff] 0.0
        %435 = vst [vmem:[#allocation2 + $0x28] sm:$0xff] 0.0
        %436 = vst [vmem:[#allocation2 + $0x30] sm:$0xff] 0.0
        %437 = vst [vmem:[#allocation2 + $0x38] sm:$0xff] 0.0
      $region60: #{gcn_mlp_forward.1} parent=55 // pred_fallthru
        _
      %v438 = vld [vmem:[%s399] sm:$0xf]
      %v439 = vld [vmem:[%s399 + $0x4] sm:$0xf]
      %v440 = vld [vmem:[%s399 + $0x8] sm:$0xf]
      %v441 = vld [vmem:[%s399 + $0xc] sm:$0xf]
      %v442 = vld [vmem:[%s399 + $0x10] sm:$0xf]
      %v443 = vld [vmem:[%s399 + $0x14] sm:$0xf]
      %v444 = vld [vmem:[%s399 + $0x18] sm:$0xf]
      %v445 = vld [vmem:[%s399 + $0x1c] sm:$0xf]
      %v446 = vld [vmem:[#allocation2] sm:$0xff]
      %v447 = vld [vmem:[#allocation2 + $0x8] sm:$0xff]
      %v448 = vld [vmem:[#allocation2 + $0x10] sm:$0xff]
      %v449 = vld [vmem:[#allocation2 + $0x18] sm:$0xff]
      %v450 = vld [vmem:[#allocation2 + $0x20] sm:$0xff]
      %v451 = vld [vmem:[#allocation2 + $0x28] sm:$0xff]
      %v452 = vld [vmem:[#allocation2 + $0x30] sm:$0xff]
      %v453 = vld [vmem:[#allocation2 + $0x38] sm:$0xff]
      %v454 = vld [vmem:[%s411] sm:$0xf]
      %v455 = vld [vmem:[%s411 + $0x4] sm:$0xf]
      %v456 = vld [vmem:[%s411 + $0x8] sm:$0xf]
      %v457 = vld [vmem:[%s411 + $0xc] sm:$0xf]
      %v458 = vld [vmem:[%s411 + $0x10] sm:$0xf]
      %v459 = vld [vmem:[%s411 + $0x14] sm:$0xf]
      %v460 = vld [vmem:[%s411 + $0x18] sm:$0xf]
      %v461 = vld [vmem:[%s411 + $0x1c] sm:$0xf]
      %v462 = vld [vmem:[%s411 + $0x20] sm:$0xf]
      %v463 = vld [vmem:[%s411 + $0x24] sm:$0xf]
      %v464 = vld [vmem:[%s411 + $0x28] sm:$0xf]
      %v465 = vld [vmem:[%s411 + $0x2c] sm:$0xf]
      %v466 = vld [vmem:[%s411 + $0x30] sm:$0xf]
      %v467 = vld [vmem:[%s411 + $0x34] sm:$0xf]
      %v468 = vld [vmem:[%s411 + $0x38] sm:$0xf]
      %v469 = vld [vmem:[%s411 + $0x3c] sm:$0xf]
      %v470 = vld [vmem:[%s417] sm:$0xf]
      %v471 = vld [vmem:[%s417 + $0x4] sm:$0xf]
      %v472 = vld [vmem:[%s417 + $0x8] sm:$0xf]
      %v473 = vld [vmem:[%s417 + $0xc] sm:$0xf]
      %v474 = vld [vmem:[%s417 + $0x10] sm:$0xf]
      %v475 = vld [vmem:[%s417 + $0x14] sm:$0xf]
      %v476 = vld [vmem:[%s417 + $0x18] sm:$0xf]
      %v477 = vld [vmem:[%s417 + $0x1c] sm:$0xf]
      %v478 = vld [vmem:[%s417 + $0x20] sm:$0xf]
      %v479 = vld [vmem:[%s417 + $0x24] sm:$0xf]
      %v480 = vld [vmem:[%s417 + $0x28] sm:$0xf]
      %v481 = vld [vmem:[%s417 + $0x2c] sm:$0xf]
      %v482 = vld [vmem:[%s417 + $0x30] sm:$0xf]
      %v483 = vld [vmem:[%s417 + $0x34] sm:$0xf]
      %v484 = vld [vmem:[%s417 + $0x38] sm:$0xf]
      %v485 = vld [vmem:[%s417 + $0x3c] sm:$0xf]
      %v494 = vunpack.c.l.b16 %v438
      %v495 = vunpack.c.l.b16 %v439
      %v496 = vunpack.c.l.b16 %v440
      %v497 = vunpack.c.l.b16 %v441
      %v498 = vunpack.c.l.b16 %v442
      %v499 = vunpack.c.l.b16 %v443
      %v500 = vunpack.c.l.b16 %v444
      %v501 = vunpack.c.l.b16 %v445
      %v502 = vpack.c.b16 %v495, %v494
      %v503 = vpack.c.b16 %v497, %v496
      %v504 = vpack.c.b16 %v499, %v498
      %v505 = vpack.c.b16 %v501, %v500
      %v526 = vunpack.c.l.b16 %v470
      %v527 = vunpack.c.l.b16 %v471
      %v528 = vunpack.c.l.b16 %v472
      %v529 = vunpack.c.l.b16 %v473
      %v530 = vunpack.c.l.b16 %v474
      %v531 = vunpack.c.l.b16 %v475
      %v532 = vunpack.c.l.b16 %v476
      %v533 = vunpack.c.l.b16 %v477
      %v534 = vunpack.c.l.b16 %v478
      %v535 = vunpack.c.l.b16 %v479
      %v536 = vunpack.c.l.b16 %v480
      %v537 = vunpack.c.l.b16 %v481
      %v538 = vunpack.c.l.b16 %v482
      %v539 = vunpack.c.l.b16 %v483
      %v540 = vunpack.c.l.b16 %v484
      %v541 = vunpack.c.l.b16 %v485
      %v542 = vpack.c.b16 %v527, %v526
      %v543 = vpack.c.b16 %v529, %v528
      %v544 = vpack.c.b16 %v531, %v530
      %v545 = vpack.c.b16 %v533, %v532
      %v546 = vpack.c.b16 %v535, %v534
      %v547 = vpack.c.b16 %v537, %v536
      %v548 = vpack.c.b16 %v539, %v538
      %v549 = vpack.c.b16 %v541, %v540
      %558 = vmatprep.subr.bf16.mxu0 0
      %559 = vmatpush1.bf16.msra.mxu0 %v542
      %560 = vmatprep.subr.bf16.mxu0 0
      %561 = vmatpush1.bf16.msra.mxu0 %v543
      %562 = vmatprep.subr.bf16.mxu0 0
      %563 = vmatpush1.bf16.msra.mxu0 %v544
      %564 = vmatprep.subr.bf16.mxu0 0
      %565 = vmatpush1.bf16.msra.mxu0 %v545
      %566 = vmatprep.subr.bf16.mxu0 0
      %567 = vmatpush1.bf16.msra.mxu0 %v546
      %568 = vmatprep.subr.bf16.mxu0 0
      %569 = vmatpush1.bf16.msra.mxu0 %v547
      %570 = vmatprep.subr.bf16.mxu0 0
      %571 = vmatpush1.bf16.msra.mxu0 %v548
      %572 = vmatprep.subr.bf16.mxu0 0
      %573 = vmatpush1.bf16.msra.mxu0 %v549
      %574 = vmatprep.subr.bf16.mxu0 0
      %575 = vmatpush1.bf16.msra.mxu0 0
      %576 = vmatprep.subr.bf16.mxu0 0
      %577 = vmatpush1.bf16.msra.mxu0 0
      %578 = vmatprep.subr.bf16.mxu0 0
      %579 = vmatpush1.bf16.msra.mxu0 0
      %580 = vmatprep.subr.bf16.mxu0 0
      %581 = vmatpush1.bf16.msra.mxu0 0
      %582 = vmatprep.subr.bf16.mxu0 0
      %583 = vmatpush1.bf16.msra.mxu0 0
      %584 = vmatprep.subr.bf16.mxu0 0
      %585 = vmatpush1.bf16.msra.mxu0 0
      %586 = vmatprep.subr.bf16.mxu0 0
      %587 = vmatpush1.bf16.msra.mxu0 0
      %588 = vmatprep.subr.bf16.mxu0 0
      %589 = vmatpush1.bf16.msra.mxu0 0
      %590 = vmatprep.mubr.bf16.mxu0 0
      %591 = vmatmul.mubr.bf16.gmra.mrb[0].mxu0 %v502
      %v592 = vpop.f32.mrb[0].mxu0
      %v593 = vadd.f32 0.0, %v592
      %v594 = vpop.f32.mrb[0].mxu0
      %v595 = vpop.f32.mrb[0].mxu0
      %v596 = vadd.f32 0.0, %v595
      %v597 = vpop.f32.mrb[0].mxu0
      %598 = vmatprep.mubr.bf16.mxu0 0
      %599 = vmatmul.mubr.bf16.gmra.mrb[0].mxu0 %v503
      %v600 = vpop.f32.mrb[0].mxu0
      %v601 = vadd.f32 0.0, %v600
      %v602 = vpop.f32.mrb[0].mxu0
      %v603 = vpop.f32.mrb[0].mxu0
      %v604 = vadd.f32 0.0, %v603
      %v605 = vpop.f32.mrb[0].mxu0
      %606 = vmatprep.mubr.bf16.mxu0 0
      %607 = vmatmul.mubr.bf16.gmra.mrb[0].mxu0 %v504
      %v608 = vpop.f32.mrb[0].mxu0
      %v609 = vadd.f32 0.0, %v608
      %v610 = vpop.f32.mrb[0].mxu0
      %v611 = vpop.f32.mrb[0].mxu0
      %v612 = vadd.f32 0.0, %v611
      %v613 = vpop.f32.mrb[0].mxu0
      %614 = vmatprep.mubr.bf16.mxu0 0
      %615 = vmatmul.mubr.bf16.gmra.mrb[0].mxu0 %v505
      %v616 = vpop.f32.mrb[0].mxu0
      %v617 = vadd.f32 0.0, %v616
      %v618 = vpop.f32.mrb[0].mxu0
      %v619 = vpop.f32.mrb[0].mxu0
      %v620 = vadd.f32 0.0, %v619
      %v621 = vpop.f32.mrb[0].mxu0
      %622 = vdwg.mxu0
      %v639 = vunpack.c.l.b16 %v454
      %v640 = vunpack.c.l.b16 %v455
      %v641 = vunpack.c.l.b16 %v456
      %v642 = vunpack.c.l.b16 %v457
      %v643 = vunpack.c.l.b16 %v458
      %v644 = vunpack.c.l.b16 %v459
      %v645 = vunpack.c.l.b16 %v460
      %v646 = vunpack.c.l.b16 %v461
      %v647 = vunpack.c.l.b16 %v462
      %v648 = vunpack.c.l.b16 %v463
      %v649 = vunpack.c.l.b16 %v464
      %v650 = vunpack.c.l.b16 %v465
      %v651 = vunpack.c.l.b16 %v466
      %v652 = vunpack.c.l.b16 %v467
      %v653 = vunpack.c.l.b16 %v468
      %v654 = vunpack.c.l.b16 %v469
      %v655 = vpack.c.b16 %v640, %v639
      %v656 = vpack.c.b16 %v642, %v641
      %v657 = vpack.c.b16 %v644, %v643
      %v658 = vpack.c.b16 %v646, %v645
      %v659 = vpack.c.b16 %v648, %v647
      %v660 = vpack.c.b16 %v650, %v649
      %v661 = vpack.c.b16 %v652, %v651
      %v662 = vpack.c.b16 %v654, %v653
      %671 = vmatprep.subr.bf16.mxu0 0
      %672 = vmatpush1.bf16.msra.mxu0 %v655
      %673 = vmatprep.subr.bf16.mxu0 0
      %674 = vmatpush1.bf16.msra.mxu0 %v656
      %675 = vmatprep.subr.bf16.mxu0 0
      %676 = vmatpush1.bf16.msra.mxu0 %v657
      %677 = vmatprep.subr.bf16.mxu0 0
      %678 = vmatpush1.bf16.msra.mxu0 %v658
      %679 = vmatprep.subr.bf16.mxu0 0
      %680 = vmatpush1.bf16.msra.mxu0 %v659
      %681 = vmatprep.subr.bf16.mxu0 0
      %682 = vmatpush1.bf16.msra.mxu0 %v660
      %683 = vmatprep.subr.bf16.mxu0 0
      %684 = vmatpush1.bf16.msra.mxu0 %v661
      %685 = vmatprep.subr.bf16.mxu0 0
      %686 = vmatpush1.bf16.msra.mxu0 %v662
      %687 = vmatprep.subr.bf16.mxu0 0
      %688 = vmatpush1.bf16.msra.mxu0 0
      %689 = vmatprep.subr.bf16.mxu0 0
      %690 = vmatpush1.bf16.msra.mxu0 0
      %691 = vmatprep.subr.bf16.mxu0 0
      %692 = vmatpush1.bf16.msra.mxu0 0
      %693 = vmatprep.subr.bf16.mxu0 0
      %694 = vmatpush1.bf16.msra.mxu0 0
      %695 = vmatprep.subr.bf16.mxu0 0
      %696 = vmatpush1.bf16.msra.mxu0 0
      %697 = vmatprep.subr.bf16.mxu0 0
      %698 = vmatpush1.bf16.msra.mxu0 0
      %699 = vmatprep.subr.bf16.mxu0 0
      %700 = vmatpush1.bf16.msra.mxu0 0
      %701 = vmatprep.subr.bf16.mxu0 0
      %702 = vmatpush1.bf16.msra.mxu0 0
      %703 = vmatprep.mubr.bf16.mxu0 0
      %704 = vmatmul.mubr.bf16.gmra.mrb[0].mxu0 %v502
      %v705 = vpop.f32.mrb[0].mxu0
      %v706 = vadd.f32 %v593, %v705
      %v707 = vpop.f32.mrb[0].mxu0
      %v708 = vpop.f32.mrb[0].mxu0
      %v709 = vadd.f32 %v596, %v708
      %v710 = vpop.f32.mrb[0].mxu0
      %711 = vmatprep.mubr.bf16.mxu0 0
      %712 = vmatmul.mubr.bf16.gmra.mrb[0].mxu0 %v503
      %v713 = vpop.f32.mrb[0].mxu0
      %v714 = vadd.f32 %v601, %v713
      %v715 = vpop.f32.mrb[0].mxu0
      %v716 = vpop.f32.mrb[0].mxu0
      %v717 = vadd.f32 %v604, %v716
      %v718 = vpop.f32.mrb[0].mxu0
      %719 = vmatprep.mubr.bf16.mxu0 0
      %720 = vmatmul.mubr.bf16.gmra.mrb[0].mxu0 %v504
      %v721 = vpop.f32.mrb[0].mxu0
      %v722 = vadd.f32 %v609, %v721
      %v723 = vpop.f32.mrb[0].mxu0
      %v724 = vpop.f32.mrb[0].mxu0
      %v725 = vadd.f32 %v612, %v724
      %v726 = vpop.f32.mrb[0].mxu0
      %727 = vmatprep.mubr.bf16.mxu0 0
      %728 = vmatmul.mubr.bf16.gmra.mrb[0].mxu0 %v505
      %v729 = vpop.f32.mrb[0].mxu0
      %v730 = vadd.f32 %v617, %v729
      %v731 = vpop.f32.mrb[0].mxu0
      %v732 = vpop.f32.mrb[0].mxu0
      %v733 = vadd.f32 %v620, %v732
      %v734 = vpop.f32.mrb[0].mxu0
      %735 = vdwg.mxu0
      %v736 = vadd.f32 %v446, %v706
      %v737 = vadd.f32 %v447, %v709
      %v738 = vadd.f32 %v448, %v714
      %v739 = vadd.f32 %v449, %v717
      %v740 = vadd.f32 %v450, %v722
      %v741 = vadd.f32 %v451, %v725
      %v742 = vadd.f32 %v452, %v730
      %v743 = vadd.f32 %v453, %v733
      %744 = vst [vmem:[#allocation2] sm:$0xff] %v736
      %745 = vst [vmem:[#allocation2 + $0x8] sm:$0xff] %v737
      %746 = vst [vmem:[#allocation2 + $0x10] sm:$0xff] %v738
      %747 = vst [vmem:[#allocation2 + $0x18] sm:$0xff] %v739
      %748 = vst [vmem:[#allocation2 + $0x20] sm:$0xff] %v740
      %749 = vst [vmem:[#allocation2 + $0x28] sm:$0xff] %v741
      %750 = vst [vmem:[#allocation2 + $0x30] sm:$0xff] %v742
      %751 = vst [vmem:[#allocation2 + $0x38] sm:$0xff] %v743
      // Predicated region
      $region61: #{gcn_mlp_forward.1} parent=55 // pred_check
        %p752 = pneg %p426
      $region62: #{gcn_mlp_forward.1} parent=55 // pred_check_branch
        %754 = sbr.rel (%p752) target = $region64
      $region63: #{gcn_mlp_forward.1} parent=55 // pred_region
        %v755 = vld [vmem:[%s405] sm:$0xff]
        %v756 = vld [vmem:[%s405 + $0x8] sm:$0xff]
        %v757 = vld [vmem:[%s405 + $0x10] sm:$0xff]
        %v758 = vld [vmem:[%s405 + $0x18] sm:$0xff]
        %v759 = vld [vmem:[%s405 + $0x20] sm:$0xff]
        %v760 = vld [vmem:[%s405 + $0x28] sm:$0xff]
        %v761 = vld [vmem:[%s405 + $0x30] sm:$0xff]
        %v762 = vld [vmem:[%s405 + $0x38] sm:$0xff]
        %v763 = vld [vmem:[#allocation2] sm:$0xff]
        %v764 = vld [vmem:[#allocation2 + $0x8] sm:$0xff]
        %v765 = vld [vmem:[#allocation2 + $0x10] sm:$0xff]
        %v766 = vld [vmem:[#allocation2 + $0x18] sm:$0xff]
        %v767 = vld [vmem:[#allocation2 + $0x20] sm:$0xff]
        %v768 = vld [vmem:[#allocation2 + $0x28] sm:$0xff]
        %v769 = vld [vmem:[#allocation2 + $0x30] sm:$0xff]
        %v770 = vld [vmem:[#allocation2 + $0x38] sm:$0xff]
        %772 = vset.pattern.permute.xlu0 0
        %773 = vperm.xlu0 %772, %v755
        %v774 = vpop.permute.xlu0 %773
        %777 = vset.pattern.permute.xlu0 0
        %778 = vperm.xlu0 %777, %v756
        %v779 = vpop.permute.xlu0 %778
        %782 = vset.pattern.permute.xlu0 0
        %783 = vperm.xlu0 %782, %v757
        %v784 = vpop.permute.xlu0 %783
        %787 = vset.pattern.permute.xlu0 0
        %788 = vperm.xlu0 %787, %v758
        %v789 = vpop.permute.xlu0 %788
        %792 = vset.pattern.permute.xlu0 0
        %793 = vperm.xlu0 %792, %v759
        %v794 = vpop.permute.xlu0 %793
        %797 = vset.pattern.permute.xlu0 0
        %798 = vperm.xlu0 %797, %v760
        %v799 = vpop.permute.xlu0 %798
        %802 = vset.pattern.permute.xlu0 0
        %803 = vperm.xlu0 %802, %v761
        %v804 = vpop.permute.xlu0 %803
        %807 = vset.pattern.permute.xlu0 0
        %808 = vperm.xlu0 %807, %v762
        %v809 = vpop.permute.xlu0 %808
        %v811 = vmul.f32 %v774, %v763
        %v812 = vmul.f32 %v779, %v764
        %v813 = vmul.f32 %v784, %v765
        %v814 = vmul.f32 %v789, %v766
        %v815 = vmul.f32 %v794, %v767
        %v816 = vmul.f32 %v799, %v768
        %v817 = vmul.f32 %v804, %v769
        %v818 = vmul.f32 %v809, %v770
        %v819 = vld [vmem:[%s4] sm:$0x1]
        %v821 = vlaneseq
        %v822 = vshrl.u32 %v821, 7
        %v823 = vsub.s32 0, %v822
        %v824 = vrot.slane %v819, %v823
        %v826 = vadd.f32 %v811, %v824
        %v827 = vadd.f32 %v812, %v824
        %v828 = vadd.f32 %v813, %v824
        %v829 = vadd.f32 %v814, %v824
        %v830 = vadd.f32 %v815, %v824
        %v831 = vadd.f32 %v816, %v824
        %v832 = vadd.f32 %v817, %v824
        %v833 = vadd.f32 %v818, %v824
        %v834 = vld [vmem:[%s5] sm:$0xff]
        %v835 = vld [vmem:[%s5 + $0x8] sm:$0xff]
        %v836 = vld [vmem:[%s5 + $0x10] sm:$0xff]
        %v837 = vld [vmem:[%s5 + $0x18] sm:$0xff]
        %v838 = vld [vmem:[%s5 + $0x20] sm:$0xff]
        %v839 = vld [vmem:[%s5 + $0x28] sm:$0xff]
        %v840 = vld [vmem:[%s5 + $0x30] sm:$0xff]
        %v841 = vld [vmem:[%s5 + $0x38] sm:$0xff]
        %v842 = vld [vmem:[%s5 + $0x40] sm:$0xff]
        %v843 = vld [vmem:[%s5 + $0x48] sm:$0xff]
        %v844 = vld [vmem:[%s5 + $0x50] sm:$0xff]
        %v845 = vld [vmem:[%s5 + $0x58] sm:$0xff]
        %v846 = vld [vmem:[%s5 + $0x60] sm:$0xff]
        %v847 = vld [vmem:[%s5 + $0x68] sm:$0xff]
        %v848 = vld [vmem:[%s5 + $0x70] sm:$0xff]
        %v849 = vld [vmem:[%s5 + $0x78] sm:$0xff]
        %v850 = vld [vmem:[%s6] sm:$0x1]
        %v852 = vlaneseq
        %v853 = vshrl.u32 %v852, 7
        %v854 = vsub.s32 0, %v853
        %v855 = vrot.slane %v850, %v854
        %857 = vmatprep.subr.mxu0 0.0
        %858 = vmatpush1.msra.mxu0 %v834
        %859 = vmatprep.subr.mxu0 0.0
        %860 = vmatpush1.msra.mxu0 %v835
        %861 = vmatprep.subr.mxu0 0.0
        %862 = vmatpush1.msra.mxu0 %v836
        %863 = vmatprep.subr.mxu0 0.0
        %864 = vmatpush1.msra.mxu0 %v837
        %865 = vmatprep.subr.mxu0 0.0
        %866 = vmatpush1.msra.mxu0 %v838
        %867 = vmatprep.subr.mxu0 0.0
        %868 = vmatpush1.msra.mxu0 %v839
        %869 = vmatprep.subr.mxu0 0.0
        %870 = vmatpush1.msra.mxu0 %v840
        %871 = vmatprep.subr.mxu0 0.0
        %872 = vmatpush1.msra.mxu0 %v841
        %873 = vmatprep.subr.mxu0 0.0
        %874 = vmatpush1.msra.mxu0 %v842
        %875 = vmatprep.subr.mxu0 0.0
        %876 = vmatpush1.msra.mxu0 %v843
        %877 = vmatprep.subr.mxu0 0.0
        %878 = vmatpush1.msra.mxu0 %v844
        %879 = vmatprep.subr.mxu0 0.0
        %880 = vmatpush1.msra.mxu0 %v845
        %881 = vmatprep.subr.mxu0 0.0
        %882 = vmatpush1.msra.mxu0 %v846
        %883 = vmatprep.subr.mxu0 0.0
        %884 = vmatpush1.msra.mxu0 %v847
        %885 = vmatprep.subr.mxu0 0.0
        %886 = vmatpush1.msra.mxu0 %v848
        %887 = vmatprep.subr.mxu0 0.0
        %888 = vmatpush1.msra.mxu0 %v849
        %889 = vmatprep.subr.mxu0 0.0
        %890 = vmatpush1.msra.mxu0 0.0
        %891 = vmatprep.subr.mxu0 0.0
        %892 = vmatpush1.msra.mxu0 0.0
        %893 = vmatprep.subr.mxu0 0.0
        %894 = vmatpush1.msra.mxu0 0.0
        %895 = vmatprep.subr.mxu0 0.0
        %896 = vmatpush1.msra.mxu0 0.0
        %897 = vmatprep.subr.mxu0 0.0
        %898 = vmatpush1.msra.mxu0 0.0
        %899 = vmatprep.subr.mxu0 0.0
        %900 = vmatpush1.msra.mxu0 0.0
        %901 = vmatprep.subr.mxu0 0.0
        %902 = vmatpush1.msra.mxu0 0.0
        %903 = vmatprep.subr.mxu0 0.0
        %904 = vmatpush1.msra.mxu0 0.0
        %905 = vmatprep.subr.mxu0 0.0
        %906 = vmatpush1.msra.mxu0 0.0
        %907 = vmatprep.subr.mxu0 0.0
        %908 = vmatpush1.msra.mxu0 0.0
        %909 = vmatprep.subr.mxu0 0.0
        %910 = vmatpush1.msra.mxu0 0.0
        %911 = vmatprep.subr.mxu0 0.0
        %912 = vmatpush1.msra.mxu0 0.0
        %913 = vmatprep.subr.mxu0 0.0
        %914 = vmatpush1.msra.mxu0 0.0
        %915 = vmatprep.subr.mxu0 0.0
        %916 = vmatpush1.msra.mxu0 0.0
        %917 = vmatprep.subr.mxu0 0.0
        %918 = vmatpush1.msra.mxu0 0.0
        %919 = vmatprep.subr.mxu0 0.0
        %920 = vmatpush1.msra.mxu0 0.0
        %921 = vmatprep.mubr.f32.mxu0 0.0
        %922 = vmatmul.mubr.f32.gmra.mrb[0].mxu0 %v826
        %v923 = vpop.f32.mrb[0].mxu0
        %v924 = vadd.f32 %v855, %v923
        %v925 = vpop.f32.mrb[0].mxu0
        %926 = vmatprep.mubr.f32.mxu0 0.0
        %927 = vmatmul.mubr.f32.gmra.mrb[0].mxu0 %v827
        %v928 = vpop.f32.mrb[0].mxu0
        %v929 = vadd.f32 %v855, %v928
        %v930 = vpop.f32.mrb[0].mxu0
        %931 = vmatprep.mubr.f32.mxu0 0.0
        %932 = vmatmul.mubr.f32.gmra.mrb[0].mxu0 %v828
        %v933 = vpop.f32.mrb[0].mxu0
        %v934 = vadd.f32 %v855, %v933
        %v935 = vpop.f32.mrb[0].mxu0
        %936 = vmatprep.mubr.f32.mxu0 0.0
        %937 = vmatmul.mubr.f32.gmra.mrb[0].mxu0 %v829
        %v938 = vpop.f32.mrb[0].mxu0
        %v939 = vadd.f32 %v855, %v938
        %v940 = vpop.f32.mrb[0].mxu0
        %941 = vmatprep.mubr.f32.mxu0 0.0
        %942 = vmatmul.mubr.f32.gmra.mrb[0].mxu0 %v830
        %v943 = vpop.f32.mrb[0].mxu0
        %v944 = vadd.f32 %v855, %v943
        %v945 = vpop.f32.mrb[0].mxu0
        %946 = vmatprep.mubr.f32.mxu0 0.0
        %947 = vmatmul.mubr.f32.gmra.mrb[0].mxu0 %v831
        %v948 = vpop.f32.mrb[0].mxu0
        %v949 = vadd.f32 %v855, %v948
        %v950 = vpop.f32.mrb[0].mxu0
        %951 = vmatprep.mubr.f32.mxu0 0.0
        %952 = vmatmul.mubr.f32.gmra.mrb[0].mxu0 %v832
        %v953 = vpop.f32.mrb[0].mxu0
        %v954 = vadd.f32 %v855, %v953
        %v955 = vpop.f32.mrb[0].mxu0
        %956 = vmatprep.mubr.f32.mxu0 0.0
        %957 = vmatmul.mubr.f32.gmra.mrb[0].mxu0 %v833
        %v958 = vpop.f32.mrb[0].mxu0
        %v959 = vadd.f32 %v855, %v958
        %v960 = vpop.f32.mrb[0].mxu0
        %961 = vdwg.mxu0
        %v962 = vmax.f32 %v924, 0.0
        %v963 = vmax.f32 %v929, 0.0
        %v964 = vmax.f32 %v934, 0.0
        %v965 = vmax.f32 %v939, 0.0
        %v966 = vmax.f32 %v944, 0.0
        %v967 = vmax.f32 %v949, 0.0
        %v968 = vmax.f32 %v954, 0.0
        %v969 = vmax.f32 %v959, 0.0
        %v970 = vld [vmem:[%s7] sm:$0xff]
        %v971 = vld [vmem:[%s7 + $0x8] sm:$0xff]
        %v972 = vld [vmem:[%s7 + $0x10] sm:$0xff]
        %v973 = vld [vmem:[%s7 + $0x18] sm:$0xff]
        %v974 = vld [vmem:[%s7 + $0x20] sm:$0xff]
        %v975 = vld [vmem:[%s7 + $0x28] sm:$0xff]
        %v976 = vld [vmem:[%s7 + $0x30] sm:$0xff]
        %v977 = vld [vmem:[%s7 + $0x38] sm:$0xff]
        %v978 = vld [vmem:[%s7 + $0x40] sm:$0xff]
        %v979 = vld [vmem:[%s7 + $0x48] sm:$0xff]
        %v980 = vld [vmem:[%s7 + $0x50] sm:$0xff]
        %v981 = vld [vmem:[%s7 + $0x58] sm:$0xff]
        %v982 = vld [vmem:[%s7 + $0x60] sm:$0xff]
        %v983 = vld [vmem:[%s7 + $0x68] sm:$0xff]
        %v984 = vld [vmem:[%s7 + $0x70] sm:$0xff]
        %v985 = vld [vmem:[%s7 + $0x78] sm:$0xff]
        %v986 = vld [vmem:[%s8] sm:$0x1]
        %v988 = vlaneseq
        %v989 = vshrl.u32 %v988, 7
        %v990 = vsub.s32 0, %v989
        %v991 = vrot.slane %v986, %v990
        %993 = vmatprep.subr.mxu0 0.0
        %994 = vmatpush1.msra.mxu0 %v970
        %995 = vmatprep.subr.mxu0 0.0
        %996 = vmatpush1.msra.mxu0 %v971
        %997 = vmatprep.subr.mxu0 0.0
        %998 = vmatpush1.msra.mxu0 %v972
        %999 = vmatprep.subr.mxu0 0.0
        %1000 = vmatpush1.msra.mxu0 %v973
        %1001 = vmatprep.subr.mxu0 0.0
        %1002 = vmatpush1.msra.mxu0 %v974
        %1003 = vmatprep.subr.mxu0 0.0
        %1004 = vmatpush1.msra.mxu0 %v975
        %1005 = vmatprep.subr.mxu0 0.0
        %1006 = vmatpush1.msra.mxu0 %v976
        %1007 = vmatprep.subr.mxu0 0.0
        %1008 = vmatpush1.msra.mxu0 %v977
        %1009 = vmatprep.subr.mxu0 0.0
        %1010 = vmatpush1.msra.mxu0 %v978
        %1011 = vmatprep.subr.mxu0 0.0
        %1012 = vmatpush1.msra.mxu0 %v979
        %1013 = vmatprep.subr.mxu0 0.0
        %1014 = vmatpush1.msra.mxu0 %v980
        %1015 = vmatprep.subr.mxu0 0.0
        %1016 = vmatpush1.msra.mxu0 %v981
        %1017 = vmatprep.subr.mxu0 0.0
        %1018 = vmatpush1.msra.mxu0 %v982
        %1019 = vmatprep.subr.mxu0 0.0
        %1020 = vmatpush1.msra.mxu0 %v983
        %1021 = vmatprep.subr.mxu0 0.0
        %1022 = vmatpush1.msra.mxu0 %v984
        %1023 = vmatprep.subr.mxu0 0.0
        %1024 = vmatpush1.msra.mxu0 %v985
        %1025 = vmatprep.subr.mxu0 0.0
        %1026 = vmatpush1.msra.mxu0 0.0
        %1027 = vmatprep.subr.mxu0 0.0
        %1028 = vmatpush1.msra.mxu0 0.0
        %1029 = vmatprep.subr.mxu0 0.0
        %1030 = vmatpush1.msra.mxu0 0.0
        %1031 = vmatprep.subr.mxu0 0.0
        %1032 = vmatpush1.msra.mxu0 0.0
        %1033 = vmatprep.subr.mxu0 0.0
        %1034 = vmatpush1.msra.mxu0 0.0
        %1035 = vmatprep.subr.mxu0 0.0
        %1036 = vmatpush1.msra.mxu0 0.0
        %1037 = vmatprep.subr.mxu0 0.0
        %1038 = vmatpush1.msra.mxu0 0.0
        %1039 = vmatprep.subr.mxu0 0.0
        %1040 = vmatpush1.msra.mxu0 0.0
        %1041 = vmatprep.subr.mxu0 0.0
        %1042 = vmatpush1.msra.mxu0 0.0
        %1043 = vmatprep.subr.mxu0 0.0
        %1044 = vmatpush1.msra.mxu0 0.0
        %1045 = vmatprep.subr.mxu0 0.0
        %1046 = vmatpush1.msra.mxu0 0.0
        %1047 = vmatprep.subr.mxu0 0.0
        %1048 = vmatpush1.msra.mxu0 0.0
        %1049 = vmatprep.subr.mxu0 0.0
        %1050 = vmatpush1.msra.mxu0 0.0
        %1051 = vmatprep.subr.mxu0 0.0
        %1052 = vmatpush1.msra.mxu0 0.0
        %1053 = vmatprep.subr.mxu0 0.0
        %1054 = vmatpush1.msra.mxu0 0.0
        %1055 = vmatprep.subr.mxu0 0.0
        %1056 = vmatpush1.msra.mxu0 0.0
        %1057 = vmatprep.mubr.f32.mxu0 0.0
        %1058 = vmatmul.mubr.f32.gmra.mrb[0].mxu0 %v962
        %v1059 = vpop.f32.mrb[0].mxu0
        %v1060 = vadd.f32 %v991, %v1059
        %v1061 = vpop.f32.mrb[0].mxu0
        %1062 = vmatprep.mubr.f32.mxu0 0.0
        %1063 = vmatmul.mubr.f32.gmra.mrb[0].mxu0 %v963
        %v1064 = vpop.f32.mrb[0].mxu0
        %v1065 = vadd.f32 %v991, %v1064
        %v1066 = vpop.f32.mrb[0].mxu0
        %1067 = vmatprep.mubr.f32.mxu0 0.0
        %1068 = vmatmul.mubr.f32.gmra.mrb[0].mxu0 %v964
        %v1069 = vpop.f32.mrb[0].mxu0
        %v1070 = vadd.f32 %v991, %v1069
        %v1071 = vpop.f32.mrb[0].mxu0
        %1072 = vmatprep.mubr.f32.mxu0 0.0
        %1073 = vmatmul.mubr.f32.gmra.mrb[0].mxu0 %v965
        %v1074 = vpop.f32.mrb[0].mxu0
        %v1075 = vadd.f32 %v991, %v1074
        %v1076 = vpop.f32.mrb[0].mxu0
        %1077 = vmatprep.mubr.f32.mxu0 0.0
        %1078 = vmatmul.mubr.f32.gmra.mrb[0].mxu0 %v966
        %v1079 = vpop.f32.mrb[0].mxu0
        %v1080 = vadd.f32 %v991, %v1079
        %v1081 = vpop.f32.mrb[0].mxu0
        %1082 = vmatprep.mubr.f32.mxu0 0.0
        %1083 = vmatmul.mubr.f32.gmra.mrb[0].mxu0 %v967
        %v1084 = vpop.f32.mrb[0].mxu0
        %v1085 = vadd.f32 %v991, %v1084
        %v1086 = vpop.f32.mrb[0].mxu0
        %1087 = vmatprep.mubr.f32.mxu0 0.0
        %1088 = vmatmul.mubr.f32.gmra.mrb[0].mxu0 %v968
        %v1089 = vpop.f32.mrb[0].mxu0
        %v1090 = vadd.f32 %v991, %v1089
        %v1091 = vpop.f32.mrb[0].mxu0
        %1092 = vmatprep.mubr.f32.mxu0 0.0
        %1093 = vmatmul.mubr.f32.gmra.mrb[0].mxu0 %v969
        %v1094 = vpop.f32.mrb[0].mxu0
        %v1095 = vadd.f32 %v991, %v1094
        %v1096 = vpop.f32.mrb[0].mxu0
        %1097 = vdwg.mxu0
        %1098 = vst [vmem:[%s423] sm:$0xff] %v1060
        %1099 = vst [vmem:[%s423 + $0x8] sm:$0xff] %v1065
        %1100 = vst [vmem:[%s423 + $0x10] sm:$0xff] %v1070
        %1101 = vst [vmem:[%s423 + $0x18] sm:$0xff] %v1075
        %1102 = vst [vmem:[%s423 + $0x20] sm:$0xff] %v1080
        %1103 = vst [vmem:[%s423 + $0x28] sm:$0xff] %v1085
        %1104 = vst [vmem:[%s423 + $0x30] sm:$0xff] %v1090
        %1105 = vst [vmem:[%s423 + $0x38] sm:$0xff] %v1095
      $region64: #{gcn_mlp_forward.1} parent=55 // pred_fallthru
        _
      %s1106 = smul.u32 8, %s24
      %p1107 = scmp.lt.s32.totalorder %s1106, 15
      %s1108 = scalar_select %p1107, %s1106, 15
      %s1109 = smul.addr %s1108, 8
      %s1110 = scalar_lea.vmem %s9, %s1109
      // Predicated region
      $region65: #{gcn_mlp_forward.1} parent=55 // pred_check
        %p1111 = pneg %p261
      $region66: #{gcn_mlp_forward.1} parent=55 // pred_check_branch
        %1113 = sbr.rel (%p1111) target = $region68
      $region67: #{gcn_mlp_forward.1} parent=55 // pred_region
        %s1114 = smul.u32 8, %s24
      $region68: #{gcn_mlp_forward.1} parent=55 // pred_fallthru
        _
    $region56: #{gcn_mlp_forward.1} parent=5 // pred_fallthru
      _
    %p1115 = scmp.le.s32.totalorder 2, %s15
    // Predicated region
    $region69: #{gcn_mlp_forward.1} parent=5 // pred_check
      %p1116 = pneg %p1115
    $region70: #{gcn_mlp_forward.1} parent=5 // pred_check_branch
      %1118 = sbr.rel (%p1116) target = $region72
    $region71: #{gcn_mlp_forward.1} parent=5 // pred_region
      %s1119 = ssub.s32 %s15, 2
      // Predicated region
      $region73: #{gcn_mlp_forward.1} parent=71 // pred_check
        %p1120 = pneg %p267
      $region74: #{gcn_mlp_forward.1} parent=71 // pred_check_branch
        %1122 = sbr.rel (%p1120) target = $region76
      $region75: #{gcn_mlp_forward.1} parent=71 // pred_region
        %s1123 = smul.u32 8, %s26
        %p1124 = scmp.lt.s32.totalorder %s1123, 15
        %s1125 = scalar_select %p1124, %s1123, 15
        %s1126 = smul.addr %s1125, 8
        %s1127 = scalar_lea.vmem %s9, %s1126
      $region76: #{gcn_mlp_forward.1} parent=71 // pred_fallthru
        _
    $region72: #{gcn_mlp_forward.1} parent=5 // pred_fallthru
      _
  $region6: #{gcn_mlp_forward.1} parent=0 // loop_footer
    %s19 = sadd.s32 1, %s15
  $region7: #{gcn_mlp_forward.1} parent=0 // loop_footer_branch
    %14 = sbr.rel target = $region3
  $region8: #{gcn_mlp_forward.1} parent=0 // loop_exit
    _

</llo_original>
